<compile_context>
chip_gen: v5e
topology: v5e:2x2
jax: 0.10.0
libtpu: 0.0.40
codegen_flags: <defaults>
</compile_context>

<pallas_src>
import jax
import jax.numpy as jnp
from jax.experimental import pallas as pl
from jax.experimental.pallas import tpu as pltpu

FEAT_IN = 32
HIDDEN = 64
NUM_PLATFORMS = 4   # len(platforms) from the CSV; fixed synthetically here.
OUT_PAD = 128       # lane-dense output width inside the kernel


def _round_up(x, m):
    return ((x + m - 1) // m) * m


# ---------------------------------------------------------------------------
# Kernel
# ---------------------------------------------------------------------------
def _gnn_kernel(a_rev_ref, a_self_ref, x_dem_ref, x_prod_src_ref, x_prod_dst_ref,
                w_stack_ref, b_stack_ref, w_lin_ref, b_lin_ref,
                out_ref, acc_rev_ref, acc_self_ref):
    k = pl.program_id(1)

    @pl.when(k == 0)
    def _():
        acc_rev_ref[...] = jnp.zeros_like(acc_rev_ref)
        acc_self_ref[...] = jnp.zeros_like(acc_self_ref)

    # Dominant work: bf16 x bf16 aggregation matmuls, f32 accumulation.
    acc_rev_ref[...] += jnp.dot(a_rev_ref[...], x_dem_ref[...],
                                preferred_element_type=jnp.float32)
    acc_self_ref[...] += jnp.dot(a_self_ref[...], x_prod_src_ref[...],
                                 preferred_element_type=jnp.float32)

    @pl.when(k == pl.num_programs(1) - 1)
    def _():
        # W_stack rows: [0.5*wl_rev ; 0.5*wl_self ; 0.5*(wr_rev+wr_self)]
        w = w_stack_ref[...]
        h = (jnp.dot(acc_rev_ref[...], w[:FEAT_IN],
                     preferred_element_type=jnp.float32)
             + jnp.dot(acc_self_ref[...], w[FEAT_IN:2 * FEAT_IN],
                       preferred_element_type=jnp.float32)
             + jnp.dot(x_prod_dst_ref[...], w[2 * FEAT_IN:],
                       preferred_element_type=jnp.float32)
             + b_stack_ref[...])
        # leaky_relu (negative_slope = 0.01, PyTorch default), f32 VPU math.
        h = jnp.where(h > 0, h, 0.01 * h)
        # Final Linear(64, P) padded to 128 lanes -> unmasked vst.
        out_ref[...] = (jnp.dot(h, w_lin_ref[...],
                                preferred_element_type=jnp.float32)
                        + b_lin_ref[...])


# ---------------------------------------------------------------------------
# Parameter folding (done once, outside the hot path)
# ---------------------------------------------------------------------------
def prepare_fused_params(params):
    # Fold HeteroConv 0.5-mean into the weights, stack the three 32->64
    # projections into one (96, 64) weight, merge the two lin_l biases.
    w_stack = 0.5 * jnp.concatenate(
        [params["wl_rev"], params["wl_self"], params["wr_rev"] + params["wr_self"]],
        axis=0).astype(jnp.float32)                                    # (96, 64)
    b_stack = (0.5 * (params["bl_rev"] + params["bl_self"])).astype(jnp.float32)

    n_plat = params["w_lin"].shape[1]
    w_lin_pad = jnp.zeros((HIDDEN, OUT_PAD), jnp.float32).at[:, :n_plat].set(
        params["w_lin"])
    b_lin_pad = jnp.zeros((1, OUT_PAD), jnp.float32).at[:, :n_plat].set(
        params["b_lin"])
    return w_stack, b_stack, w_lin_pad, b_lin_pad, n_plat


# ---------------------------------------------------------------------------
# Wrapper
# ---------------------------------------------------------------------------
def marketing_gnn_forward(x_prod, x_dem, a_rev, a_self, params,
                          tile_m=256, tile_k=512):
    n_prod, n_dem = x_prod.shape[0], x_dem.shape[0]
    w_stack, b_stack, w_lin_pad, b_lin_pad, n_plat = prepare_fused_params(params)

    # --- tile sizing (clamped for toy graphs; sweep on real sizes) ----------
    tile_m = _round_up(min(tile_m, _round_up(n_prod, 8)), 8)
    k_max = max(n_dem, n_prod)
    tile_k = _round_up(min(tile_k, _round_up(k_max, 128)), 128)
    m_pad = _round_up(n_prod, tile_m)
    k_pad = _round_up(k_max, tile_k)
    grid = (m_pad // tile_m, k_pad // tile_k)

    # --- padded operands (no identity / block-diagonal structural zeros) ----
    def pad2(a, rows, cols, dtype):
        out = jnp.zeros((rows, cols), dtype)
        return out.at[:a.shape[0], :a.shape[1]].set(a.astype(dtype))

    a_rev_p = pad2(a_rev, m_pad, k_pad, jnp.bfloat16)       # dominant streams
    a_self_p = pad2(a_self, m_pad, k_pad, jnp.bfloat16)     # in bf16
    x_dem_p = pad2(x_dem, k_pad, FEAT_IN, jnp.bfloat16)
    x_prod_src_p = pad2(x_prod, k_pad, FEAT_IN, jnp.bfloat16)
    x_prod_dst_p = pad2(x_prod, m_pad, FEAT_IN, jnp.float32)  # small, keep f32

    # --- advisory cost / VMEM budget -----------------------------------------
    flops = (4 * m_pad * k_pad * FEAT_IN            # two aggregation matmuls
             + 6 * m_pad * FEAT_IN * HIDDEN         # three 32->64 projections
             + 2 * m_pad * HIDDEN * OUT_PAD)        # final linear
    bytes_accessed = (2 * m_pad * k_pad * 2
                      + 2 * k_pad * FEAT_IN * 2
                      + m_pad * FEAT_IN * 4
                      + (3 * FEAT_IN * HIDDEN + HIDDEN
                         + HIDDEN * OUT_PAD + OUT_PAD) * 4
                      + m_pad * OUT_PAD * 4)
    block_bytes = (2 * tile_m * tile_k * 2          # two bf16 A tiles
                   + 2 * tile_k * FEAT_IN * 2       # two bf16 X tiles
                   + tile_m * FEAT_IN * 4           # x_prod (dst) tile
                   + tile_m * OUT_PAD * 4           # output tile
                   + 2 * tile_m * FEAT_IN * 4)      # accumulator scratch
    # 2x for double buffering + slack; capped so it also fits v7x (64 MiB).
    vmem_limit = int(min(max(4 * block_bytes + (1 << 20), 16 << 20), 56 << 20))

    def _call(single_buffer_consts):
        # Grid-invariant operands don't need double buffering.
        const_kw = {"pipeline_mode": pl.Buffered(1)} if single_buffer_consts else {}
        return pl.pallas_call(
            _gnn_kernel,
            out_shape=jax.ShapeDtypeStruct((m_pad, OUT_PAD), jnp.float32),
            grid=grid,
            in_specs=[
                pl.BlockSpec((tile_m, tile_k), lambda i, k: (i, k)),    # a_rev
                pl.BlockSpec((tile_m, tile_k), lambda i, k: (i, k)),    # a_self
                pl.BlockSpec((tile_k, FEAT_IN), lambda i, k: (k, 0)),   # x_dem
                pl.BlockSpec((tile_k, FEAT_IN), lambda i, k: (k, 0)),   # x_prod (src)
                pl.BlockSpec((tile_m, FEAT_IN), lambda i, k: (i, 0)),   # x_prod (dst)
                pl.BlockSpec((3 * FEAT_IN, HIDDEN), lambda i, k: (0, 0), **const_kw),
                pl.BlockSpec((1, HIDDEN), lambda i, k: (0, 0), **const_kw),
                pl.BlockSpec((HIDDEN, OUT_PAD), lambda i, k: (0, 0), **const_kw),
                pl.BlockSpec((1, OUT_PAD), lambda i, k: (0, 0), **const_kw),
            ],
            out_specs=pl.BlockSpec((tile_m, OUT_PAD), lambda i, k: (i, 0)),
            scratch_shapes=[pltpu.VMEM((tile_m, FEAT_IN), jnp.float32),
                            pltpu.VMEM((tile_m, FEAT_IN), jnp.float32)],
            compiler_params=pltpu.CompilerParams(
                dimension_semantics=("parallel", "arbitrary"),
                vmem_limit_bytes=vmem_limit),
            cost_estimate=pl.CostEstimate(flops=flops, transcendentals=0,
                                          bytes_accessed=bytes_accessed),
        )(a_rev_p, a_self_p, x_dem_p, x_prod_src_p, x_prod_dst_p,
          w_stack, b_stack, w_lin_pad, b_lin_pad)

    try:
        out = _call(True)
    except Exception:
        # Fallback for JAX/libtpu builds without Buffered(1) pipeline mode.
        out = _call(False)

    return out[:n_prod, :n_plat]


# ---------------------------------------------------------------------------
# Glue / reference / params (plain JAX)
# ---------------------------------------------------------------------------
def build_mean_adjacency(edge_index, num_src, num_dst):
    """Row-normalized dense adjacency so scatter-mean == A @ x_src."""
    # TODO(synk): replace with CSR + scalar-prefetched gather at real scale.
    src, dst = edge_index[0], edge_index[1]
    a = jnp.zeros((num_dst, num_src), jnp.float32).at[dst, src].add(1.0)
    deg = jnp.clip(jnp.sum(a, axis=1, keepdims=True), 1.0, None)
    return a / deg


def reference_forward(x_prod, x_dem, a_rev, a_self, p):
    """Unfused f32 reference matching the PyTorch module semantics."""
    h_rev = a_rev @ x_dem @ p["wl_rev"] + p["bl_rev"] + x_prod @ p["wr_rev"]
    h_self = a_self @ x_prod @ p["wl_self"] + p["bl_self"] + x_prod @ p["wr_self"]
    h = 0.5 * (h_rev + h_self)
    h = jnp.where(h > 0, h, 0.01 * h)
    return h @ p["w_lin"] + p["b_lin"]


def init_params(key):
    ks = jax.random.split(key, 8)
    scale = 0.1

    def w(k, shape):
        return (scale * jax.random.normal(k, shape)).astype(jnp.float32)

    return {
        # SAGEConv ('demographic','rev_targets','product'): lin_l (w+b), lin_r (no bias)
        "wl_rev": w(ks[0], (FEAT_IN, HIDDEN)),
        "bl_rev": w(ks[1], (1, HIDDEN)),
        "wr_rev": w(ks[2], (FEAT_IN, HIDDEN)),
        # SAGEConv ('product','self','product')
        "wl_self": w(ks[3], (FEAT_IN, HIDDEN)),
        "bl_self": w(ks[4], (1, HIDDEN)),
        "wr_self": w(ks[5], (FEAT_IN, HIDDEN)),
        # Linear(64, len(platforms))
        "w_lin": w(ks[6], (HIDDEN, NUM_PLATFORMS)),
        "b_lin": w(ks[7], (1, NUM_PLATFORMS)),
    }


if __name__ == "__main__":
    key = jax.random.PRNGKey(0)
    k_xp, k_xd, k_e1, k_e2, k_p = jax.random.split(key, 5)

    n_prod, n_dem = 8, 8
    x_prod = jax.random.normal(k_xp, (n_prod, FEAT_IN), dtype=jnp.float32)
    x_dem = jax.random.normal(k_xd, (n_dem, FEAT_IN), dtype=jnp.float32)

    # edge_index_dict entries relevant to the 'product' output
    n_edges = 16
    ei_rev = jnp.stack([  # demographic -> product
        jax.random.randint(k_e1, (n_edges,), 0, n_dem),
        jax.random.randint(k_e2, (n_edges,), 0, n_prod),
    ]).astype(jnp.int32)
    ei_self = jnp.stack([  # product -> product (self loops)
        jnp.arange(n_prod, dtype=jnp.int32),
        jnp.arange(n_prod, dtype=jnp.int32),
    ])

    a_rev = build_mean_adjacency(ei_rev, n_dem, n_prod)     # [Np, Nd]
    a_self = build_mean_adjacency(ei_self, n_prod, n_prod)  # [Np, Np]

    params = init_params(k_p)

    # TODO(synk): HeteroConv outputs for 'demographic'/'platform' node types are
    # computed by the PyTorch module but never used by forward(); omitted here.

    out = marketing_gnn_forward(x_prod, x_dem, a_rev, a_self, params)
    out = jax.block_until_ready(out)

    ref = reference_forward(x_prod, x_dem, a_rev, a_self, params)
    assert out.shape == (n_prod, NUM_PLATFORMS)
    # bf16 aggregation inputs with f32 accumulation -> loosened tolerance.
    assert jnp.allclose(out, ref, atol=2e-2, rtol=2e-2)

    print("KERNEL_OK")
</pallas_src>

<mosaic_0001>
module attributes {stable_mosaic.version = 11 : i64} {
  func.func @_gnn_kernel(%arg0: i32, %arg1: i32, %arg2: memref<8x128xbf16, #tpu.memory_space<vmem>>, %arg3: memref<8x128xbf16, #tpu.memory_space<vmem>>, %arg4: memref<128x32xbf16, #tpu.memory_space<vmem>>, %arg5: memref<128x32xbf16, #tpu.memory_space<vmem>>, %arg6: memref<8x32xf32, #tpu.memory_space<vmem>>, %arg7: memref<96x64xf32, #tpu.memory_space<vmem>>, %arg8: memref<1x64xf32, #tpu.memory_space<vmem>>, %arg9: memref<64x128xf32, #tpu.memory_space<vmem>>, %arg10: memref<1x128xf32, #tpu.memory_space<vmem>>, %arg11: memref<8x128xf32, #tpu.memory_space<vmem>>, %arg12: memref<8x32xf32, #tpu.memory_space<vmem>>, %arg13: memref<8x32xf32, #tpu.memory_space<vmem>>) attributes {dimension_semantics = [#tpu.dimension_semantics<parallel>, #tpu.dimension_semantics<arbitrary>], iteration_bounds = array<i64: 1, 1>, scalar_prefetch = 0 : i64, scratch_operands = 2 : i64, tpu.core_type = #tpu.core_type<tc>, window_params = [{transform_indices = @transform_0, window_bounds = array<i64: 8, 128>}, {transform_indices = @transform_1, window_bounds = array<i64: 8, 128>}, {transform_indices = @transform_2, window_bounds = array<i64: 128, 32>}, {transform_indices = @transform_3, window_bounds = array<i64: 128, 32>}, {transform_indices = @transform_4, window_bounds = array<i64: 8, 32>}, {pipeline_mode = #tpu.pipeline_mode<synchronous>, transform_indices = @transform_5, window_bounds = array<i64: 96, 64>}, {pipeline_mode = #tpu.pipeline_mode<synchronous>, transform_indices = @transform_6, window_bounds = array<i64: 1, 64>}, {pipeline_mode = #tpu.pipeline_mode<synchronous>, transform_indices = @transform_7, window_bounds = array<i64: 64, 128>}, {pipeline_mode = #tpu.pipeline_mode<synchronous>, transform_indices = @transform_8, window_bounds = array<i64: 1, 128>}, {transform_indices = @transform_9, window_bounds = array<i64: 8, 128>}]} {
    %c0_i32 = arith.constant 0 : i32
    %0 = arith.cmpi eq, %arg1, %c0_i32 : i32
    %1 = arith.extui %0 : i1 to i32
    %c0_i32_0 = arith.constant 0 : i32
    %2 = arith.cmpi ne, %1, %c0_i32_0 : i32
    scf.if %2 {
      %cst_19 = arith.constant 0.000000e+00 : f32
      %18 = vector.broadcast %cst_19 : f32 to vector<8x32xf32>
      %c0_20 = arith.constant 0 : index
      %c0_21 = arith.constant 0 : index
      %19 = vector.load %arg12[%c0_20, %c0_21] : memref<8x32xf32, #tpu.memory_space<vmem>>, vector<8x32xf32>
      tpu.vector_store %arg12[%c0_20, %c0_21], %18 {strides = array<i32>} : memref<8x32xf32, #tpu.memory_space<vmem>>, vector<8x32xf32>,
      %cst_22 = arith.constant 0.000000e+00 : f32
      %20 = vector.broadcast %cst_22 : f32 to vector<8x32xf32>
      %c0_23 = arith.constant 0 : index
      %c0_24 = arith.constant 0 : index
      %21 = vector.load %arg13[%c0_23, %c0_24] : memref<8x32xf32, #tpu.memory_space<vmem>>, vector<8x32xf32>
      tpu.vector_store %arg13[%c0_23, %c0_24], %20 {strides = array<i32>} : memref<8x32xf32, #tpu.memory_space<vmem>>, vector<8x32xf32>,
    } else {
    }
    %c0 = arith.constant 0 : index
    %c0_1 = arith.constant 0 : index
    %3 = vector.load %arg12[%c0, %c0_1] : memref<8x32xf32, #tpu.memory_space<vmem>>, vector<8x32xf32>
    %c0_2 = arith.constant 0 : index
    %c0_3 = arith.constant 0 : index
    %4 = vector.load %arg2[%c0_2, %c0_3] : memref<8x128xbf16, #tpu.memory_space<vmem>>, vector<8x128xbf16>
    %c0_4 = arith.constant 0 : index
    %c0_5 = arith.constant 0 : index
    %5 = vector.load %arg4[%c0_4, %c0_5] : memref<128x32xbf16, #tpu.memory_space<vmem>>, vector<128x32xbf16>
    %cst = arith.constant dense<0.000000e+00> : vector<8x32xf32>
    %6 = tpu.matmul %4, %5, %cst {dimension_numbers = #tpu.dot_dimension_numbers<[1], [0], [0], [1], [0, 0, 1, 1], [], []>} : vector<8x128xbf16>, vector<128x32xbf16>, vector<8x32xf32> -> vector<8x32xf32>
    %7 = arith.addf %3, %6 : vector<8x32xf32>
    %c0_6 = arith.constant 0 : index
    %c0_7 = arith.constant 0 : index
    %8 = vector.load %arg12[%c0_6, %c0_7] : memref<8x32xf32, #tpu.memory_space<vmem>>, vector<8x32xf32>
    tpu.vector_store %arg12[%c0_6, %c0_7], %7 {strides = array<i32>} : memref<8x32xf32, #tpu.memory_space<vmem>>, vector<8x32xf32>,
    %c0_8 = arith.constant 0 : index
    %c0_9 = arith.constant 0 : index
    %9 = vector.load %arg13[%c0_8, %c0_9] : memref<8x32xf32, #tpu.memory_space<vmem>>, vector<8x32xf32>
    %c0_10 = arith.constant 0 : index
    %c0_11 = arith.constant 0 : index
    %10 = vector.load %arg3[%c0_10, %c0_11] : memref<8x128xbf16, #tpu.memory_space<vmem>>, vector<8x128xbf16>
    %c0_12 = arith.constant 0 : index
    %c0_13 = arith.constant 0 : index
    %11 = vector.load %arg5[%c0_12, %c0_13] : memref<128x32xbf16, #tpu.memory_space<vmem>>, vector<128x32xbf16>
    %cst_14 = arith.constant dense<0.000000e+00> : vector<8x32xf32>
    %12 = tpu.matmul %10, %11, %cst_14 {dimension_numbers = #tpu.dot_dimension_numbers<[1], [0], [0], [1], [0, 0, 1, 1], [], []>} : vector<8x128xbf16>, vector<128x32xbf16>, vector<8x32xf32> -> vector<8x32xf32>
    %13 = arith.addf %9, %12 : vector<8x32xf32>
    %c0_15 = arith.constant 0 : index
    %c0_16 = arith.constant 0 : index
    %14 = vector.load %arg13[%c0_15, %c0_16] : memref<8x32xf32, #tpu.memory_space<vmem>>, vector<8x32xf32>
    tpu.vector_store %arg13[%c0_15, %c0_16], %13 {strides = array<i32>} : memref<8x32xf32, #tpu.memory_space<vmem>>, vector<8x32xf32>,
    %c0_i32_17 = arith.constant 0 : i32
    %15 = arith.cmpi eq, %arg1, %c0_i32_17 : i32
    %16 = arith.extui %15 : i1 to i32
    %c0_i32_18 = arith.constant 0 : i32
    %17 = arith.cmpi ne, %16, %c0_i32_18 : i32
    scf.if %17 {
      %c0_19 = arith.constant 0 : index
      %c0_20 = arith.constant 0 : index
      %18 = vector.load %arg7[%c0_19, %c0_20] : memref<96x64xf32, #tpu.memory_space<vmem>>, vector<96x64xf32>
      %c0_21 = arith.constant 0 : index
      %c0_22 = arith.constant 0 : index
      %19 = vector.load %arg12[%c0_21, %c0_22] : memref<8x32xf32, #tpu.memory_space<vmem>>, vector<8x32xf32>
      %20 = vector.extract_strided_slice %18 {offsets = [0, 0], sizes = [32, 64], strides = [1, 1]} : vector<96x64xf32> to vector<32x64xf32>
      %cst_23 = arith.constant dense<0.000000e+00> : vector<8x64xf32>
      %21 = tpu.matmul %19, %20, %cst_23 {dimension_numbers = #tpu.dot_dimension_numbers<[1], [0], [0], [1], [0, 0, 1, 1], [], []>} : vector<8x32xf32>, vector<32x64xf32>, vector<8x64xf32> -> vector<8x64xf32>
      %c0_24 = arith.constant 0 : index
      %c0_25 = arith.constant 0 : index
      %22 = vector.load %arg13[%c0_24, %c0_25] : memref<8x32xf32, #tpu.memory_space<vmem>>, vector<8x32xf32>
      %23 = vector.extract_strided_slice %18 {offsets = [32, 0], sizes = [32, 64], strides = [1, 1]} : vector<96x64xf32> to vector<32x64xf32>
      %cst_26 = arith.constant dense<0.000000e+00> : vector<8x64xf32>
      %24 = tpu.matmul %22, %23, %cst_26 {dimension_numbers = #tpu.dot_dimension_numbers<[1], [0], [0], [1], [0, 0, 1, 1], [], []>} : vector<8x32xf32>, vector<32x64xf32>, vector<8x64xf32> -> vector<8x64xf32>
      %25 = arith.addf %21, %24 : vector<8x64xf32>
      %c0_27 = arith.constant 0 : index
      %c0_28 = arith.constant 0 : index
      %26 = vector.load %arg6[%c0_27, %c0_28] : memref<8x32xf32, #tpu.memory_space<vmem>>, vector<8x32xf32>
      %27 = vector.extract_strided_slice %18 {offsets = [64, 0], sizes = [32, 64], strides = [1, 1]} : vector<96x64xf32> to vector<32x64xf32>
      %cst_29 = arith.constant dense<0.000000e+00> : vector<8x64xf32>
      %28 = tpu.matmul %26, %27, %cst_29 {dimension_numbers = #tpu.dot_dimension_numbers<[1], [0], [0], [1], [0, 0, 1, 1], [], []>} : vector<8x32xf32>, vector<32x64xf32>, vector<8x64xf32> -> vector<8x64xf32>
      %29 = arith.addf %25, %28 : vector<8x64xf32>
      %c0_30 = arith.constant 0 : index
      %c0_31 = arith.constant 0 : index
      %30 = vector.load %arg8[%c0_30, %c0_31] : memref<1x64xf32, #tpu.memory_space<vmem>>, vector<1x64xf32>
      %31 = vector.broadcast %30 : vector<1x64xf32> to vector<8x64xf32>
      %32 = arith.addf %29, %31 : vector<8x64xf32>
      %cst_32 = arith.constant 0.000000e+00 : f32
      %33 = vector.broadcast %cst_32 : f32 to vector<8x64xf32>
      %34 = arith.cmpf ogt, %32, %33 : vector<8x64xf32>
      %cst_33 = arith.constant 0.00999999977 : f32
      %35 = vector.broadcast %cst_33 : f32 to vector<8x64xf32>
      %36 = arith.mulf %35, %32 : vector<8x64xf32>
      %37 = arith.select %34, %32, %36 : vector<8x64xi1>, vector<8x64xf32>
      %c0_34 = arith.constant 0 : index
      %c0_35 = arith.constant 0 : index
      %38 = vector.load %arg9[%c0_34, %c0_35] : memref<64x128xf32, #tpu.memory_space<vmem>>, vector<64x128xf32>
      %cst_36 = arith.constant dense<0.000000e+00> : vector<8x128xf32>
      %39 = tpu.matmul %37, %38, %cst_36 {dimension_numbers = #tpu.dot_dimension_numbers<[1], [0], [0], [1], [0, 0, 1, 1], [], []>} : vector<8x64xf32>, vector<64x128xf32>, vector<8x128xf32> -> vector<8x128xf32>
      %c0_37 = arith.constant 0 : index
      %c0_38 = arith.constant 0 : index
      %40 = vector.load %arg10[%c0_37, %c0_38] : memref<1x128xf32, #tpu.memory_space<vmem>>, vector<1x128xf32>
      %41 = vector.broadcast %40 : vector<1x128xf32> to vector<8x128xf32>
      %42 = arith.addf %39, %41 : vector<8x128xf32>
      %c0_39 = arith.constant 0 : index
      %c0_40 = arith.constant 0 : index
      %43 = vector.load %arg11[%c0_39, %c0_40] : memref<8x128xf32, #tpu.memory_space<vmem>>, vector<8x128xf32>
      tpu.vector_store %arg11[%c0_39, %c0_40], %42 {strides = array<i32>} : memref<8x128xf32, #tpu.memory_space<vmem>>, vector<8x128xf32>,
    } else {
    }
    return
  }
  func.func @transform_0(%arg0: i32, %arg1: i32) -> (i32, i32) {
    %c0_i32 = arith.constant 0 : i32
    return %arg0, %arg1 : i32, i32
  }
  func.func @transform_1(%arg0: i32, %arg1: i32) -> (i32, i32) {
    %c0_i32 = arith.constant 0 : i32
    return %arg0, %arg1 : i32, i32
  }
  func.func @transform_2(%arg0: i32, %arg1: i32) -> (i32, i32) {
    %c0_i32 = arith.constant 0 : i32
    %c0_i32_0 = arith.constant 0 : i32
    return %arg1, %c0_i32 : i32, i32
  }
  func.func @transform_3(%arg0: i32, %arg1: i32) -> (i32, i32) {
    %c0_i32 = arith.constant 0 : i32
    %c0_i32_0 = arith.constant 0 : i32
    return %arg1, %c0_i32 : i32, i32
  }
  func.func @transform_4(%arg0: i32, %arg1: i32) -> (i32, i32) {
    %c0_i32 = arith.constant 0 : i32
    %c0_i32_0 = arith.constant 0 : i32
    return %arg0, %c0_i32 : i32, i32
  }
  func.func @transform_5(%arg0: i32, %arg1: i32) -> (i32, i32) {
    %c0_i32 = arith.constant 0 : i32
    %c0_i32_0 = arith.constant 0 : i32
    %c0_i32_1 = arith.constant 0 : i32
    return %c0_i32, %c0_i32_0 : i32, i32
  }
  func.func @transform_6(%arg0: i32, %arg1: i32) -> (i32, i32) {
    %c0_i32 = arith.constant 0 : i32
    %c0_i32_0 = arith.constant 0 : i32
    %c0_i32_1 = arith.constant 0 : i32
    return %c0_i32, %c0_i32_0 : i32, i32
  }
  func.func @transform_7(%arg0: i32, %arg1: i32) -> (i32, i32) {
    %c0_i32 = arith.constant 0 : i32
    %c0_i32_0 = arith.constant 0 : i32
    %c0_i32_1 = arith.constant 0 : i32
    return %c0_i32, %c0_i32_0 : i32, i32
  }
  func.func @transform_8(%arg0: i32, %arg1: i32) -> (i32, i32) {
    %c0_i32 = arith.constant 0 : i32
    %c0_i32_0 = arith.constant 0 : i32
    %c0_i32_1 = arith.constant 0 : i32
    return %c0_i32, %c0_i32_0 : i32, i32
  }
  func.func @transform_9(%arg0: i32, %arg1: i32) -> (i32, i32) {
    %c0_i32 = arith.constant 0 : i32
    %c0_i32_0 = arith.constant 0 : i32
    return %arg0, %c0_i32 : i32, i32
  }
}

module attributes {stable_mosaic.version = 11 : i64} {
  func.func @_gnn_kernel(%arg0: i32, %arg1: i32, %arg2: memref<8x128xbf16, #tpu.memory_space<vmem>>, %arg3: memref<8x128xbf16, #tpu.memory_space<vmem>>, %arg4: memref<128x32xbf16, #tpu.memory_space<vmem>>, %arg5: memref<128x32xbf16, #tpu.memory_space<vmem>>, %arg6: memref<8x32xf32, #tpu.memory_space<vmem>>, %arg7: memref<96x64xf32, #tpu.memory_space<vmem>>, %arg8: memref<1x64xf32, #tpu.memory_space<vmem>>, %arg9: memref<64x128xf32, #tpu.memory_space<vmem>>, %arg10: memref<1x128xf32, #tpu.memory_space<vmem>>, %arg11: memref<8x128xf32, #tpu.memory_space<vmem>>, %arg12: memref<8x32xf32, #tpu.memory_space<vmem>>, %arg13: memref<8x32xf32, #tpu.memory_space<vmem>>) attributes {dimension_semantics = [#tpu.dimension_semantics<parallel>, #tpu.dimension_semantics<arbitrary>], iteration_bounds = array<i64: 1, 1>, scalar_prefetch = 0 : i64, scratch_operands = 2 : i64, tpu.core_type = #tpu.core_type<tc>, window_params = [{transform_indices = @transform_0, window_bounds = array<i64: 8, 128>}, {transform_indices = @transform_1, window_bounds = array<i64: 8, 128>}, {transform_indices = @transform_2, window_bounds = array<i64: 128, 32>}, {transform_indices = @transform_3, window_bounds = array<i64: 128, 32>}, {transform_indices = @transform_4, window_bounds = array<i64: 8, 32>}, {pipeline_mode = #tpu.pipeline_mode<synchronous>, transform_indices = @transform_5, window_bounds = array<i64: 96, 64>}, {pipeline_mode = #tpu.pipeline_mode<synchronous>, transform_indices = @transform_6, window_bounds = array<i64: 1, 64>}, {pipeline_mode = #tpu.pipeline_mode<synchronous>, transform_indices = @transform_7, window_bounds = array<i64: 64, 128>}, {pipeline_mode = #tpu.pipeline_mode<synchronous>, transform_indices = @transform_8, window_bounds = array<i64: 1, 128>}, {transform_indices = @transform_9, window_bounds = array<i64: 8, 128>}]} {
    %c0_i32 = arith.constant 0 : i32
    %0 = arith.cmpi eq, %arg1, %c0_i32 : i32
    %1 = arith.extui %0 : i1 to i32
    %c0_i32_0 = arith.constant 0 : i32
    %2 = arith.cmpi ne, %1, %c0_i32_0 : i32
    scf.if %2 {
      %cst_19 = arith.constant 0.000000e+00 : f32
      %18 = vector.broadcast %cst_19 : f32 to vector<8x32xf32>
      %c0_20 = arith.constant 0 : index
      %c0_21 = arith.constant 0 : index
      %19 = vector.load %arg12[%c0_20, %c0_21] : memref<8x32xf32, #tpu.memory_space<vmem>>, vector<8x32xf32>
      tpu.vector_store %arg12[%c0_20, %c0_21], %18 {strides = array<i32>} : memref<8x32xf32, #tpu.memory_space<vmem>>, vector<8x32xf32>,
      %cst_22 = arith.constant 0.000000e+00 : f32
      %20 = vector.broadcast %cst_22 : f32 to vector<8x32xf32>
      %c0_23 = arith.constant 0 : index
      %c0_24 = arith.constant 0 : index
      %21 = vector.load %arg13[%c0_23, %c0_24] : memref<8x32xf32, #tpu.memory_space<vmem>>, vector<8x32xf32>
      tpu.vector_store %arg13[%c0_23, %c0_24], %20 {strides = array<i32>} : memref<8x32xf32, #tpu.memory_space<vmem>>, vector<8x32xf32>,
    } else {
    }
    %c0 = arith.constant 0 : index
    %c0_1 = arith.constant 0 : index
    %3 = vector.load %arg12[%c0, %c0_1] : memref<8x32xf32, #tpu.memory_space<vmem>>, vector<8x32xf32>
    %c0_2 = arith.constant 0 : index
    %c0_3 = arith.constant 0 : index
    %4 = vector.load %arg2[%c0_2, %c0_3] : memref<8x128xbf16, #tpu.memory_space<vmem>>, vector<8x128xbf16>
    %c0_4 = arith.constant 0 : index
    %c0_5 = arith.constant 0 : index
    %5 = vector.load %arg4[%c0_4, %c0_5] : memref<128x32xbf16, #tpu.memory_space<vmem>>, vector<128x32xbf16>
    %cst = arith.constant dense<0.000000e+00> : vector<8x32xf32>
    %6 = tpu.matmul %4, %5, %cst {dimension_numbers = #tpu.dot_dimension_numbers<[1], [0], [0], [1], [0, 0, 1, 1], [], []>} : vector<8x128xbf16>, vector<128x32xbf16>, vector<8x32xf32> -> vector<8x32xf32>
    %7 = arith.addf %3, %6 : vector<8x32xf32>
    %c0_6 = arith.constant 0 : index
    %c0_7 = arith.constant 0 : index
    %8 = vector.load %arg12[%c0_6, %c0_7] : memref<8x32xf32, #tpu.memory_space<vmem>>, vector<8x32xf32>
    tpu.vector_store %arg12[%c0_6, %c0_7], %7 {strides = array<i32>} : memref<8x32xf32, #tpu.memory_space<vmem>>, vector<8x32xf32>,
    %c0_8 = arith.constant 0 : index
    %c0_9 = arith.constant 0 : index
    %9 = vector.load %arg13[%c0_8, %c0_9] : memref<8x32xf32, #tpu.memory_space<vmem>>, vector<8x32xf32>
    %c0_10 = arith.constant 0 : index
    %c0_11 = arith.constant 0 : index
    %10 = vector.load %arg3[%c0_10, %c0_11] : memref<8x128xbf16, #tpu.memory_space<vmem>>, vector<8x128xbf16>
    %c0_12 = arith.constant 0 : index
    %c0_13 = arith.constant 0 : index
    %11 = vector.load %arg5[%c0_12, %c0_13] : memref<128x32xbf16, #tpu.memory_space<vmem>>, vector<128x32xbf16>
    %cst_14 = arith.constant dense<0.000000e+00> : vector<8x32xf32>
    %12 = tpu.matmul %10, %11, %cst_14 {dimension_numbers = #tpu.dot_dimension_numbers<[1], [0], [0], [1], [0, 0, 1, 1], [], []>} : vector<8x128xbf16>, vector<128x32xbf16>, vector<8x32xf32> -> vector<8x32xf32>
    %13 = arith.addf %9, %12 : vector<8x32xf32>
    %c0_15 = arith.constant 0 : index
    %c0_16 = arith.constant 0 : index
    %14 = vector.load %arg13[%c0_15, %c0_16] : memref<8x32xf32, #tpu.memory_space<vmem>>, vector<8x32xf32>
    tpu.vector_store %arg13[%c0_15, %c0_16], %13 {strides = array<i32>} : memref<8x32xf32, #tpu.memory_space<vmem>>, vector<8x32xf32>,
    %c0_i32_17 = arith.constant 0 : i32
    %15 = arith.cmpi eq, %arg1, %c0_i32_17 : i32
    %16 = arith.extui %15 : i1 to i32
    %c0_i32_18 = arith.constant 0 : i32
    %17 = arith.cmpi ne, %16, %c0_i32_18 : i32
    scf.if %17 {
      %c0_19 = arith.constant 0 : index
      %c0_20 = arith.constant 0 : index
      %18 = vector.load %arg7[%c0_19, %c0_20] : memref<96x64xf32, #tpu.memory_space<vmem>>, vector<96x64xf32>
      %c0_21 = arith.constant 0 : index
      %c0_22 = arith.constant 0 : index
      %19 = vector.load %arg12[%c0_21, %c0_22] : memref<8x32xf32, #tpu.memory_space<vmem>>, vector<8x32xf32>
      %20 = vector.extract_strided_slice %18 {offsets = [0, 0], sizes = [32, 64], strides = [1, 1]} : vector<96x64xf32> to vector<32x64xf32>
      %cst_23 = arith.constant dense<0.000000e+00> : vector<8x64xf32>
      %21 = tpu.matmul %19, %20, %cst_23 {dimension_numbers = #tpu.dot_dimension_numbers<[1], [0], [0], [1], [0, 0, 1, 1], [], []>} : vector<8x32xf32>, vector<32x64xf32>, vector<8x64xf32> -> vector<8x64xf32>
      %c0_24 = arith.constant 0 : index
      %c0_25 = arith.constant 0 : index
      %22 = vector.load %arg13[%c0_24, %c0_25] : memref<8x32xf32, #tpu.memory_space<vmem>>, vector<8x32xf32>
      %23 = vector.extract_strided_slice %18 {offsets = [32, 0], sizes = [32, 64], strides = [1, 1]} : vector<96x64xf32> to vector<32x64xf32>
      %cst_26 = arith.constant dense<0.000000e+00> : vector<8x64xf32>
      %24 = tpu.matmul %22, %23, %cst_26 {dimension_numbers = #tpu.dot_dimension_numbers<[1], [0], [0], [1], [0, 0, 1, 1], [], []>} : vector<8x32xf32>, vector<32x64xf32>, vector<8x64xf32> -> vector<8x64xf32>
      %25 = arith.addf %21, %24 : vector<8x64xf32>
      %c0_27 = arith.constant 0 : index
      %c0_28 = arith.constant 0 : index
      %26 = vector.load %arg6[%c0_27, %c0_28] : memref<8x32xf32, #tpu.memory_space<vmem>>, vector<8x32xf32>
      %27 = vector.extract_strided_slice %18 {offsets = [64, 0], sizes = [32, 64], strides = [1, 1]} : vector<96x64xf32> to vector<32x64xf32>
      %cst_29 = arith.constant dense<0.000000e+00> : vector<8x64xf32>
      %28 = tpu.matmul %26, %27, %cst_29 {dimension_numbers = #tpu.dot_dimension_numbers<[1], [0], [0], [1], [0, 0, 1, 1], [], []>} : vector<8x32xf32>, vector<32x64xf32>, vector<8x64xf32> -> vector<8x64xf32>
      %29 = arith.addf %25, %28 : vector<8x64xf32>
      %c0_30 = arith.constant 0 : index
      %c0_31 = arith.constant 0 : index
      %30 = vector.load %arg8[%c0_30, %c0_31] : memref<1x64xf32, #tpu.memory_space<vmem>>, vector<1x64xf32>
      %31 = vector.broadcast %30 : vector<1x64xf32> to vector<8x64xf32>
      %32 = arith.addf %29, %31 : vector<8x64xf32>
      %cst_32 = arith.constant 0.000000e+00 : f32
      %33 = vector.broadcast %cst_32 : f32 to vector<8x64xf32>
      %34 = arith.cmpf ogt, %32, %33 : vector<8x64xf32>
      %cst_33 = arith.constant 0.00999999977 : f32
      %35 = vector.broadcast %cst_33 : f32 to vector<8x64xf32>
      %36 = arith.mulf %35, %32 : vector<8x64xf32>
      %37 = arith.select %34, %32, %36 : vector<8x64xi1>, vector<8x64xf32>
      %c0_34 = arith.constant 0 : index
      %c0_35 = arith.constant 0 : index
      %38 = vector.load %arg9[%c0_34, %c0_35] : memref<64x128xf32, #tpu.memory_space<vmem>>, vector<64x128xf32>
      %cst_36 = arith.constant dense<0.000000e+00> : vector<8x128xf32>
      %39 = tpu.matmul %37, %38, %cst_36 {dimension_numbers = #tpu.dot_dimension_numbers<[1], [0], [0], [1], [0, 0, 1, 1], [], []>} : vector<8x64xf32>, vector<64x128xf32>, vector<8x128xf32> -> vector<8x128xf32>
      %c0_37 = arith.constant 0 : index
      %c0_38 = arith.constant 0 : index
      %40 = vector.load %arg10[%c0_37, %c0_38] : memref<1x128xf32, #tpu.memory_space<vmem>>, vector<1x128xf32>
      %41 = vector.broadcast %40 : vector<1x128xf32> to vector<8x128xf32>
      %42 = arith.addf %39, %41 : vector<8x128xf32>
      %c0_39 = arith.constant 0 : index
      %c0_40 = arith.constant 0 : index
      %43 = vector.load %arg11[%c0_39, %c0_40] : memref<8x128xf32, #tpu.memory_space<vmem>>, vector<8x128xf32>
      tpu.vector_store %arg11[%c0_39, %c0_40], %42 {strides = array<i32>} : memref<8x128xf32, #tpu.memory_space<vmem>>, vector<8x128xf32>,
    } else {
    }
    return
  }
  func.func @transform_0(%arg0: i32, %arg1: i32) -> (i32, i32) {
    %c0_i32 = arith.constant 0 : i32
    return %arg0, %arg1 : i32, i32
  }
  func.func @transform_1(%arg0: i32, %arg1: i32) -> (i32, i32) {
    %c0_i32 = arith.constant 0 : i32
    return %arg0, %arg1 : i32, i32
  }
  func.func @transform_2(%arg0: i32, %arg1: i32) -> (i32, i32) {
    %c0_i32 = arith.constant 0 : i32
    %c0_i32_0 = arith.constant 0 : i32
    return %arg1, %c0_i32 : i32, i32
  }
  func.func @transform_3(%arg0: i32, %arg1: i32) -> (i32, i32) {
    %c0_i32 = arith.constant 0 : i32
    %c0_i32_0 = arith.constant 0 : i32
    return %arg1, %c0_i32 : i32, i32
  }
  func.func @transform_4(%arg0: i32, %arg1: i32) -> (i32, i32) {
    %c0_i32 = arith.constant 0 : i32
    %c0_i32_0 = arith.constant 0 : i32
    return %arg0, %c0_i32 : i32, i32
  }
  func.func @transform_5(%arg0: i32, %arg1: i32) -> (i32, i32) {
    %c0_i32 = arith.constant 0 : i32
    %c0_i32_0 = arith.constant 0 : i32
    %c0_i32_1 = arith.constant 0 : i32
    return %c0_i32, %c0_i32_0 : i32, i32
  }
  func.func @transform_6(%arg0: i32, %arg1: i32) -> (i32, i32) {
    %c0_i32 = arith.constant 0 : i32
    %c0_i32_0 = arith.constant 0 : i32
    %c0_i32_1 = arith.constant 0 : i32
    return %c0_i32, %c0_i32_0 : i32, i32
  }
  func.func @transform_7(%arg0: i32, %arg1: i32) -> (i32, i32) {
    %c0_i32 = arith.constant 0 : i32
    %c0_i32_0 = arith.constant 0 : i32
    %c0_i32_1 = arith.constant 0 : i32
    return %c0_i32, %c0_i32_0 : i32, i32
  }
  func.func @transform_8(%arg0: i32, %arg1: i32) -> (i32, i32) {
    %c0_i32 = arith.constant 0 : i32
    %c0_i32_0 = arith.constant 0 : i32
    %c0_i32_1 = arith.constant 0 : i32
    return %c0_i32, %c0_i32_0 : i32, i32
  }
  func.func @transform_9(%arg0: i32, %arg1: i32) -> (i32, i32) {
    %c0_i32 = arith.constant 0 : i32
    %c0_i32_0 = arith.constant 0 : i32
    return %arg0, %c0_i32 : i32, i32
  }
}

</mosaic_0001>

<llo_original>
// kernel: tpu_custom_call.1
$region0: #{tpu_custom_call.1}
  #allocation0 [shape = 'u32[]', space=smem, size = 0x4, offset = 0x4, fixed_abs, tag = 'smem constant byte address 0x4 - core index']
  #allocation1 [shape = 'u32[72,128]{1,0:T(1,128)}', space=vmem, size = 0x9000, scoped, tag = 'internal scratch']
  #allocation2 [shape = 'f32[8,32]{1,0:T(8,128)}', space=vmem, size = 0x1000, scoped, tag = 'scratch operand']
  #allocation3 [shape = 'f32[8,32]{1,0:T(8,128)}', space=vmem, size = 0x1000, scoped, tag = 'scratch operand']
  %s0 = inlined_call_operand.vmem [shape: bf16[8,128], index: 0, kind: input, shape index: {}]
  %s1 = inlined_call_operand.vmem [shape: bf16[8,128], index: 1, kind: input, shape index: {}]
  %s2 = inlined_call_operand.vmem [shape: bf16[128,32], index: 2, kind: input, shape index: {}]
  %s3 = inlined_call_operand.vmem [shape: bf16[128,32], index: 3, kind: input, shape index: {}]
  %s4 = inlined_call_operand.vmem [shape: f32[8,32], index: 4, kind: input, shape index: {}]
  %s5 = inlined_call_operand.vmem [shape: f32[96,64], index: 5, kind: input, shape index: {}]
  %s6 = inlined_call_operand.vmem [shape: f32[1,64], index: 6, kind: input, shape index: {}]
  %s7 = inlined_call_operand.vmem [shape: f32[64,128], index: 7, kind: input, shape index: {}]
  %s8 = inlined_call_operand.vmem [shape: f32[1,128], index: 8, kind: input, shape index: {}]
  %s9 = inlined_call_operand.hbm [shape: f32[8,128], index: 9, kind: output, shape index: {}]
  %s10 = sld [smem:[#allocation0]]
  $region54: #{tpu_custom_call.1} parent=0
    _
  %s12 = ssub.s32 1, %s10
  %s13 = scalar_select 0, %s12, %s10
  $region1: #{tpu_custom_call.1} parent=0
    #allocation4 [shape = 'u8[4096]{0}', space=vmem, size = 0x1000, scoped, tag = 'output window, operand 0, single buffered']
    #allocation5 [shape = 's32[1]{0}', space=sflag, size = 0x4, scoped, tag = 'scoped memory for tpu_custom_call.1']
    %14 = vsyncpa [#allocation5], 0
    // Predicated region
    $region2: #{tpu_custom_call.1} parent=1 // pred_check
      _
    $region3: #{tpu_custom_call.1} parent=1 // pred_check_branch
      %16 = sbr.rel (0) target = $region5
    $region4: #{tpu_custom_call.1} parent=1 // pred_region
      _
    $region5: #{tpu_custom_call.1} parent=1 // pred_fallthru
      _
    // Predicated region
    $region6: #{tpu_custom_call.1} parent=1 // pred_check
      _
    $region7: #{tpu_custom_call.1} parent=1 // pred_check_branch
      %18 = sbr.rel (0) target = $region9
    $region8: #{tpu_custom_call.1} parent=1 // pred_region
      _
    $region9: #{tpu_custom_call.1} parent=1 // pred_fallthru
      _
    // Predicated region
    $region10: #{tpu_custom_call.1} parent=1 // pred_check
      _
    $region11: #{tpu_custom_call.1} parent=1 // pred_check_branch
      %20 = sbr.rel (0) target = $region13
    $region12: #{tpu_custom_call.1} parent=1 // pred_region
      _
    $region13: #{tpu_custom_call.1} parent=1 // pred_fallthru
      _
    // Predicated region
    $region14: #{tpu_custom_call.1} parent=1 // pred_check
      _
    $region15: #{tpu_custom_call.1} parent=1 // pred_check_branch
      %22 = sbr.rel (0) target = $region17
    $region16: #{tpu_custom_call.1} parent=1 // pred_region
      _
    $region17: #{tpu_custom_call.1} parent=1 // pred_fallthru
      _
    // Predicated region
    $region18: #{tpu_custom_call.1} parent=1 // pred_check
      _
    $region19: #{tpu_custom_call.1} parent=1 // pred_check_branch
      %24 = sbr.rel (0) target = $region21
    $region20: #{tpu_custom_call.1} parent=1 // pred_region
      _
    $region21: #{tpu_custom_call.1} parent=1 // pred_fallthru
      _
    // Predicated region
    $region22: #{tpu_custom_call.1} parent=1 // pred_check
      _
    $region23: #{tpu_custom_call.1} parent=1 // pred_check_branch
      %26 = sbr.rel (0) target = $region25
    $region24: #{tpu_custom_call.1} parent=1 // pred_region
      _
    $region25: #{tpu_custom_call.1} parent=1 // pred_fallthru
      _
    // Predicated region
    $region26: #{tpu_custom_call.1} parent=1 // pred_check
      _
    $region27: #{tpu_custom_call.1} parent=1 // pred_check_branch
      %28 = sbr.rel (0) target = $region29
    $region28: #{tpu_custom_call.1} parent=1 // pred_region
      _
    $region29: #{tpu_custom_call.1} parent=1 // pred_fallthru
      _
    // Predicated region
    $region30: #{tpu_custom_call.1} parent=1 // pred_check
      _
    $region31: #{tpu_custom_call.1} parent=1 // pred_check_branch
      %30 = sbr.rel (0) target = $region33
    $region32: #{tpu_custom_call.1} parent=1 // pred_region
      _
    $region33: #{tpu_custom_call.1} parent=1 // pred_fallthru
      _
    // Predicated region
    $region34: #{tpu_custom_call.1} parent=1 // pred_check
      _
    $region35: #{tpu_custom_call.1} parent=1 // pred_check_branch
      %32 = sbr.rel (0) target = $region37
    $region36: #{tpu_custom_call.1} parent=1 // pred_region
      _
    $region37: #{tpu_custom_call.1} parent=1 // pred_fallthru
      _
    %p33 = scmp.eq.s32.totalorder 0, 0
    // Predicated region
    $region38: #{tpu_custom_call.1} parent=1 // pred_check
      %p34 = pneg %p33
    $region39: #{tpu_custom_call.1} parent=1 // pred_check_branch
      %36 = sbr.rel (%p34) target = $region41
    $region40: #{tpu_custom_call.1} parent=1 // pred_region
      %vm37 = vcmask 261120
      %38 = vst.msk [vmem:[#allocation2] sm:$0xff] %vm37, 0.0
      %39 = vst.msk [vmem:[#allocation3] sm:$0xff] %vm37, 0.0
    $region41: #{tpu_custom_call.1} parent=1 // pred_fallthru
      _
    %v40 = vld [vmem:[#allocation2] sm:$0xff]
    %v41 = vld [vmem:[%s0] sm:$0xf]
    %v42 = vld [vmem:[%s2] sm:$0xf]
    %v43 = vld [vmem:[%s2 + $0x4] sm:$0xf]
    %v44 = vld [vmem:[%s2 + $0x8] sm:$0xf]
    %v45 = vld [vmem:[%s2 + $0xc] sm:$0xf]
    %v46 = vld [vmem:[%s2 + $0x10] sm:$0xf]
    %v47 = vld [vmem:[%s2 + $0x14] sm:$0xf]
    %v48 = vld [vmem:[%s2 + $0x18] sm:$0xf]
    %v49 = vld [vmem:[%s2 + $0x1c] sm:$0xf]
    %v50 = vld [vmem:[%s2 + $0x20] sm:$0xf]
    %v51 = vld [vmem:[%s2 + $0x24] sm:$0xf]
    %v52 = vld [vmem:[%s2 + $0x28] sm:$0xf]
    %v53 = vld [vmem:[%s2 + $0x2c] sm:$0xf]
    %v54 = vld [vmem:[%s2 + $0x30] sm:$0xf]
    %v55 = vld [vmem:[%s2 + $0x34] sm:$0xf]
    %v56 = vld [vmem:[%s2 + $0x38] sm:$0xf]
    %v57 = vld [vmem:[%s2 + $0x3c] sm:$0xf]
    %v74 = vunpack.c.l.b16 %v42
    %v75 = vunpack.c.l.b16 %v43
    %v76 = vunpack.c.l.b16 %v44
    %v77 = vunpack.c.l.b16 %v45
    %v78 = vunpack.c.l.b16 %v46
    %v79 = vunpack.c.l.b16 %v47
    %v80 = vunpack.c.l.b16 %v48
    %v81 = vunpack.c.l.b16 %v49
    %v82 = vunpack.c.l.b16 %v50
    %v83 = vunpack.c.l.b16 %v51
    %v84 = vunpack.c.l.b16 %v52
    %v85 = vunpack.c.l.b16 %v53
    %v86 = vunpack.c.l.b16 %v54
    %v87 = vunpack.c.l.b16 %v55
    %v88 = vunpack.c.l.b16 %v56
    %v89 = vunpack.c.l.b16 %v57
    %v90 = vpack.c.b16 %v75, %v74
    %v91 = vpack.c.b16 %v77, %v76
    %v92 = vpack.c.b16 %v79, %v78
    %v93 = vpack.c.b16 %v81, %v80
    %v94 = vpack.c.b16 %v83, %v82
    %v95 = vpack.c.b16 %v85, %v84
    %v96 = vpack.c.b16 %v87, %v86
    %v97 = vpack.c.b16 %v89, %v88
    %106 = vmatpush.bf16.msra.mxu0 %v97
    %107 = vmatpush.bf16.msra.mxu0 %v96
    %108 = vmatpush.bf16.msra.mxu0 %v95
    %109 = vmatpush.bf16.msra.mxu0 %v94
    %110 = vmatpush.bf16.msra.mxu0 %v93
    %111 = vmatpush.bf16.msra.mxu0 %v92
    %112 = vmatpush.bf16.msra.mxu0 %v91
    %113 = vmatpush.bf16.msra.mxu0 %v90
    %114 = vmatmul.bf16.gmra.mxu0 %v41
    %v115 = vpop.f32.mrf.mxu0
    %v116 = vadd.f32 0.0, %v115
    %v117 = vpop.f32.mrf.mxu0
    %118 = vdwg.mxu0
    %v119 = vadd.f32 %v40, %v116
    %vm120 = vcmask 261120
    %121 = vst.msk [vmem:[#allocation2] sm:$0xff] %vm120, %v119
    %v122 = vld [vmem:[#allocation3] sm:$0xff]
    %v123 = vld [vmem:[%s1] sm:$0xf]
    %v124 = vld [vmem:[%s3] sm:$0xf]
    %v125 = vld [vmem:[%s3 + $0x4] sm:$0xf]
    %v126 = vld [vmem:[%s3 + $0x8] sm:$0xf]
    %v127 = vld [vmem:[%s3 + $0xc] sm:$0xf]
    %v128 = vld [vmem:[%s3 + $0x10] sm:$0xf]
    %v129 = vld [vmem:[%s3 + $0x14] sm:$0xf]
    %v130 = vld [vmem:[%s3 + $0x18] sm:$0xf]
    %v131 = vld [vmem:[%s3 + $0x1c] sm:$0xf]
    %v132 = vld [vmem:[%s3 + $0x20] sm:$0xf]
    %v133 = vld [vmem:[%s3 + $0x24] sm:$0xf]
    %v134 = vld [vmem:[%s3 + $0x28] sm:$0xf]
    %v135 = vld [vmem:[%s3 + $0x2c] sm:$0xf]
    %v136 = vld [vmem:[%s3 + $0x30] sm:$0xf]
    %v137 = vld [vmem:[%s3 + $0x34] sm:$0xf]
    %v138 = vld [vmem:[%s3 + $0x38] sm:$0xf]
    %v139 = vld [vmem:[%s3 + $0x3c] sm:$0xf]
    %v156 = vunpack.c.l.b16 %v124
    %v157 = vunpack.c.l.b16 %v125
    %v158 = vunpack.c.l.b16 %v126
    %v159 = vunpack.c.l.b16 %v127
    %v160 = vunpack.c.l.b16 %v128
    %v161 = vunpack.c.l.b16 %v129
    %v162 = vunpack.c.l.b16 %v130
    %v163 = vunpack.c.l.b16 %v131
    %v164 = vunpack.c.l.b16 %v132
    %v165 = vunpack.c.l.b16 %v133
    %v166 = vunpack.c.l.b16 %v134
    %v167 = vunpack.c.l.b16 %v135
    %v168 = vunpack.c.l.b16 %v136
    %v169 = vunpack.c.l.b16 %v137
    %v170 = vunpack.c.l.b16 %v138
    %v171 = vunpack.c.l.b16 %v139
    %v172 = vpack.c.b16 %v157, %v156
    %v173 = vpack.c.b16 %v159, %v158
    %v174 = vpack.c.b16 %v161, %v160
    %v175 = vpack.c.b16 %v163, %v162
    %v176 = vpack.c.b16 %v165, %v164
    %v177 = vpack.c.b16 %v167, %v166
    %v178 = vpack.c.b16 %v169, %v168
    %v179 = vpack.c.b16 %v171, %v170
    %188 = vmatpush.bf16.msra.mxu0 %v179
    %189 = vmatpush.bf16.msra.mxu0 %v178
    %190 = vmatpush.bf16.msra.mxu0 %v177
    %191 = vmatpush.bf16.msra.mxu0 %v176
    %192 = vmatpush.bf16.msra.mxu0 %v175
    %193 = vmatpush.bf16.msra.mxu0 %v174
    %194 = vmatpush.bf16.msra.mxu0 %v173
    %195 = vmatpush.bf16.msra.mxu0 %v172
    %196 = vmatmul.bf16.gmra.mxu0 %v123
    %v197 = vpop.f32.mrf.mxu0
    %v198 = vadd.f32 0.0, %v197
    %v199 = vpop.f32.mrf.mxu0
    %200 = vdwg.mxu0
    %v201 = vadd.f32 %v122, %v198
    %202 = vst.msk [vmem:[#allocation3] sm:$0xff] %vm120, %v201
    // Predicated region
    $region42: #{tpu_custom_call.1} parent=1 // pred_check
      %p203 = pneg %p33
    $region43: #{tpu_custom_call.1} parent=1 // pred_check_branch
      %205 = sbr.rel (%p203) target = $region45
    $region44: #{tpu_custom_call.1} parent=1 // pred_region
      %v206 = vld [vmem:[%s5] sm:$0xff]
      %v207 = vld [vmem:[%s5 + $0x8] sm:$0xff]
      %v208 = vld [vmem:[%s5 + $0x10] sm:$0xff]
      %v209 = vld [vmem:[%s5 + $0x18] sm:$0xff]
      %v210 = vld [vmem:[%s5 + $0x20] sm:$0xff]
      %v211 = vld [vmem:[%s5 + $0x28] sm:$0xff]
      %v212 = vld [vmem:[%s5 + $0x30] sm:$0xff]
      %v213 = vld [vmem:[%s5 + $0x38] sm:$0xff]
      %v214 = vld [vmem:[%s5 + $0x40] sm:$0xff]
      %v215 = vld [vmem:[%s5 + $0x48] sm:$0xff]
      %v216 = vld [vmem:[%s5 + $0x50] sm:$0xff]
      %v217 = vld [vmem:[%s5 + $0x58] sm:$0xff]
      %v218 = vld [vmem:[#allocation2] sm:$0xff]
      %v219 = vld [vmem:[#allocation3] sm:$0xff]
      %v221 = vsel %vm120, %v219, 0
      %223 = vmatpush.msra.mxu0 0.0
      %224 = vmatpush.msra.mxu0 0.0
      %225 = vmatpush.msra.mxu0 0.0
      %226 = vmatpush.msra.mxu0 0.0
      %227 = vmatpush.msra.mxu0 0.0
      %228 = vmatpush.msra.mxu0 0.0
      %229 = vmatpush.msra.mxu0 0.0
      %230 = vmatpush.msra.mxu0 0.0
      %231 = vmatpush.msra.mxu0 0.0
      %232 = vmatpush.msra.mxu0 0.0
      %233 = vmatpush.msra.mxu0 0.0
      %234 = vmatpush.msra.mxu0 0.0
      %235 = vmatpush.msra.mxu0 %v213
      %236 = vmatpush.msra.mxu0 %v212
      %237 = vmatpush.msra.mxu0 %v211
      %238 = vmatpush.msra.mxu0 %v210
      %239 = vmatmul.f32.gmra.mxu0 %v221
      %v240 = vpop.f32.mrf.mxu0
      %v241 = vadd.f32 0.0, %v240
      %242 = vdwg.mxu0
      %v244 = vsel %vm120, %v218, 0
      %246 = vmatpush.msra.mxu0 0.0
      %247 = vmatpush.msra.mxu0 0.0
      %248 = vmatpush.msra.mxu0 0.0
      %249 = vmatpush.msra.mxu0 0.0
      %250 = vmatpush.msra.mxu0 0.0
      %251 = vmatpush.msra.mxu0 0.0
      %252 = vmatpush.msra.mxu0 0.0
      %253 = vmatpush.msra.mxu0 0.0
      %254 = vmatpush.msra.mxu0 0.0
      %255 = vmatpush.msra.mxu0 0.0
      %256 = vmatpush.msra.mxu0 0.0
      %257 = vmatpush.msra.mxu0 0.0
      %258 = vmatpush.msra.mxu0 %v209
      %259 = vmatpush.msra.mxu0 %v208
      %260 = vmatpush.msra.mxu0 %v207
      %261 = vmatpush.msra.mxu0 %v206
      %262 = vmatmul.f32.gmra.mxu0 %v244
      %v263 = vpop.f32.mrf.mxu0
      %v264 = vadd.f32 %v241, %v263
      %265 = vdwg.mxu0
      %v266 = vld [vmem:[%s4] sm:$0xff]
      %v268 = vsel %vm120, %v266, 0
      %270 = vmatpush.msra.mxu0 0.0
      %271 = vmatpush.msra.mxu0 0.0
      %272 = vmatpush.msra.mxu0 0.0
      %273 = vmatpush.msra.mxu0 0.0
      %274 = vmatpush.msra.mxu0 0.0
      %275 = vmatpush.msra.mxu0 0.0
      %276 = vmatpush.msra.mxu0 0.0
      %277 = vmatpush.msra.mxu0 0.0
      %278 = vmatpush.msra.mxu0 0.0
      %279 = vmatpush.msra.mxu0 0.0
      %280 = vmatpush.msra.mxu0 0.0
      %281 = vmatpush.msra.mxu0 0.0
      %282 = vmatpush.msra.mxu0 %v217
      %283 = vmatpush.msra.mxu0 %v216
      %284 = vmatpush.msra.mxu0 %v215
      %285 = vmatpush.msra.mxu0 %v214
      %286 = vmatmul.f32.gmra.mxu0 %v268
      %v287 = vpop.f32.mrf.mxu0
      %v288 = vadd.f32 0.0, %v287
      %289 = vdwg.mxu0
      %v290 = vadd.f32 %v264, %v288
      %v291 = vld [vmem:[%s6] sm:$0x1]
      %v293 = vperm.slane %v291, 0
      %v295 = vadd.f32 %v290, %v293
      %vm296 = vcmp.gt.f32.partialorder %v295, 0.0
      %v297 = vmul.f32 %v295, 0.01
      %v298 = vsel %vm296, %v295, %v297
      %v299 = vld [vmem:[%s7] sm:$0xff]
      %v300 = vld [vmem:[%s7 + $0x8] sm:$0xff]
      %v301 = vld [vmem:[%s7 + $0x10] sm:$0xff]
      %v302 = vld [vmem:[%s7 + $0x18] sm:$0xff]
      %v303 = vld [vmem:[%s7 + $0x20] sm:$0xff]
      %v304 = vld [vmem:[%s7 + $0x28] sm:$0xff]
      %v305 = vld [vmem:[%s7 + $0x30] sm:$0xff]
      %v306 = vld [vmem:[%s7 + $0x38] sm:$0xff]
      %v307 = vld [vmem:[%s8] sm:$0x1]
      %v309 = vperm.slane %v307, 0
      %vm311 = vcmask 523264
      %v313 = vsel %vm311, %v298, 0
      %315 = vmatpush.msra.mxu0 0.0
      %316 = vmatpush.msra.mxu0 0.0
      %317 = vmatpush.msra.mxu0 0.0
      %318 = vmatpush.msra.mxu0 0.0
      %319 = vmatpush.msra.mxu0 0.0
      %320 = vmatpush.msra.mxu0 0.0
      %321 = vmatpush.msra.mxu0 0.0
      %322 = vmatpush.msra.mxu0 0.0
      %323 = vmatpush.msra.mxu0 %v306
      %324 = vmatpush.msra.mxu0 %v305
      %325 = vmatpush.msra.mxu0 %v304
      %326 = vmatpush.msra.mxu0 %v303
      %327 = vmatpush.msra.mxu0 %v302
      %328 = vmatpush.msra.mxu0 %v301
      %329 = vmatpush.msra.mxu0 %v300
      %330 = vmatpush.msra.mxu0 %v299
      %331 = vmatmul.f32.gmra.mxu0 %v313
      %v332 = vpop.f32.mrf.mxu0
      %v333 = vadd.f32 %v309, %v332
      %334 = vdwg.mxu0
      %335 = vst [vmem:[#allocation4] sm:$0xff] %v333
    $region45: #{tpu_custom_call.1} parent=1 // pred_fallthru
      _
    // Predicated region
    $region46: #{tpu_custom_call.1} parent=1 // pred_check
      _
    $region47: #{tpu_custom_call.1} parent=1 // pred_check_branch
      %337 = sbr.rel (0) target = $region49
    $region48: #{tpu_custom_call.1} parent=1 // pred_region
      %339 = vsyncadd [#allocation5], 0
      %s341 = sshll.u32 [#allocation4], 4
      %s342 = int_to_ptr.vmem [resolvable:$true] %s341
      %s343 = sshll.u32 %s9, 4
      %s344 = int_to_ptr.hbm [resolvable:$true] %s343
      %346 = dma.vmem_to_hbm [thread:$0]  %s342, 128, %s344, [#allocation5]
    $region49: #{tpu_custom_call.1} parent=1 // pred_fallthru
      _
    // Predicated region
    $region50: #{tpu_custom_call.1} parent=1 // pred_check
      _
    $region51: #{tpu_custom_call.1} parent=1 // pred_check_branch
      %348 = sbr.rel (0) target = $region53
    $region52: #{tpu_custom_call.1} parent=1 // pred_region
      %350 = dma.done [#allocation5], 128
    $region53: #{tpu_custom_call.1} parent=1 // pred_fallthru
      _
    %351 = vsyncpa [#allocation5], 1

// kernel: tpu_custom_call.1
$region0: #{tpu_custom_call.1}
  #allocation0 [shape = 'u32[]', space=smem, size = 0x4, offset = 0x4, fixed_abs, tag = 'smem constant byte address 0x4 - core index']
  #allocation1 [shape = 'u32[72,128]{1,0:T(1,128)}', space=vmem, size = 0x9000, scoped, tag = 'internal scratch']
  #allocation2 [shape = 'f32[8,32]{1,0:T(8,128)}', space=vmem, size = 0x1000, scoped, tag = 'scratch operand']
  #allocation3 [shape = 'f32[8,32]{1,0:T(8,128)}', space=vmem, size = 0x1000, scoped, tag = 'scratch operand']
  %s0 = inlined_call_operand.vmem [shape: bf16[8,128], index: 0, kind: input, shape index: {}]
  %s1 = inlined_call_operand.vmem [shape: bf16[8,128], index: 1, kind: input, shape index: {}]
  %s2 = inlined_call_operand.vmem [shape: bf16[128,32], index: 2, kind: input, shape index: {}]
  %s3 = inlined_call_operand.vmem [shape: bf16[128,32], index: 3, kind: input, shape index: {}]
  %s4 = inlined_call_operand.vmem [shape: f32[8,32], index: 4, kind: input, shape index: {}]
  %s5 = inlined_call_operand.vmem [shape: f32[96,64], index: 5, kind: input, shape index: {}]
  %s6 = inlined_call_operand.vmem [shape: f32[1,64], index: 6, kind: input, shape index: {}]
  %s7 = inlined_call_operand.vmem [shape: f32[64,128], index: 7, kind: input, shape index: {}]
  %s8 = inlined_call_operand.vmem [shape: f32[1,128], index: 8, kind: input, shape index: {}]
  %s9 = inlined_call_operand.hbm [shape: f32[8,128], index: 9, kind: output, shape index: {}]
  %s10 = sld [smem:[#allocation0]]
  $region54: #{tpu_custom_call.1} parent=0
    _
  %s12 = ssub.s32 1, %s10
  %s13 = scalar_select 0, %s12, %s10
  $region1: #{tpu_custom_call.1} parent=0
    #allocation4 [shape = 'u8[4096]{0}', space=vmem, size = 0x1000, scoped, tag = 'output window, operand 0, single buffered']
    #allocation5 [shape = 's32[1]{0}', space=sflag, size = 0x4, scoped, tag = 'scoped memory for tpu_custom_call.1']
    %14 = vsyncpa [#allocation5], 0
    // Predicated region
    $region2: #{tpu_custom_call.1} parent=1 // pred_check
      _
    $region3: #{tpu_custom_call.1} parent=1 // pred_check_branch
      %16 = sbr.rel (0) target = $region5
    $region4: #{tpu_custom_call.1} parent=1 // pred_region
      _
    $region5: #{tpu_custom_call.1} parent=1 // pred_fallthru
      _
    // Predicated region
    $region6: #{tpu_custom_call.1} parent=1 // pred_check
      _
    $region7: #{tpu_custom_call.1} parent=1 // pred_check_branch
      %18 = sbr.rel (0) target = $region9
    $region8: #{tpu_custom_call.1} parent=1 // pred_region
      _
    $region9: #{tpu_custom_call.1} parent=1 // pred_fallthru
      _
    // Predicated region
    $region10: #{tpu_custom_call.1} parent=1 // pred_check
      _
    $region11: #{tpu_custom_call.1} parent=1 // pred_check_branch
      %20 = sbr.rel (0) target = $region13
    $region12: #{tpu_custom_call.1} parent=1 // pred_region
      _
    $region13: #{tpu_custom_call.1} parent=1 // pred_fallthru
      _
    // Predicated region
    $region14: #{tpu_custom_call.1} parent=1 // pred_check
      _
    $region15: #{tpu_custom_call.1} parent=1 // pred_check_branch
      %22 = sbr.rel (0) target = $region17
    $region16: #{tpu_custom_call.1} parent=1 // pred_region
      _
    $region17: #{tpu_custom_call.1} parent=1 // pred_fallthru
      _
    // Predicated region
    $region18: #{tpu_custom_call.1} parent=1 // pred_check
      _
    $region19: #{tpu_custom_call.1} parent=1 // pred_check_branch
      %24 = sbr.rel (0) target = $region21
    $region20: #{tpu_custom_call.1} parent=1 // pred_region
      _
    $region21: #{tpu_custom_call.1} parent=1 // pred_fallthru
      _
    // Predicated region
    $region22: #{tpu_custom_call.1} parent=1 // pred_check
      _
    $region23: #{tpu_custom_call.1} parent=1 // pred_check_branch
      %26 = sbr.rel (0) target = $region25
    $region24: #{tpu_custom_call.1} parent=1 // pred_region
      _
    $region25: #{tpu_custom_call.1} parent=1 // pred_fallthru
      _
    // Predicated region
    $region26: #{tpu_custom_call.1} parent=1 // pred_check
      _
    $region27: #{tpu_custom_call.1} parent=1 // pred_check_branch
      %28 = sbr.rel (0) target = $region29
    $region28: #{tpu_custom_call.1} parent=1 // pred_region
      _
    $region29: #{tpu_custom_call.1} parent=1 // pred_fallthru
      _
    // Predicated region
    $region30: #{tpu_custom_call.1} parent=1 // pred_check
      _
    $region31: #{tpu_custom_call.1} parent=1 // pred_check_branch
      %30 = sbr.rel (0) target = $region33
    $region32: #{tpu_custom_call.1} parent=1 // pred_region
      _
    $region33: #{tpu_custom_call.1} parent=1 // pred_fallthru
      _
    // Predicated region
    $region34: #{tpu_custom_call.1} parent=1 // pred_check
      _
    $region35: #{tpu_custom_call.1} parent=1 // pred_check_branch
      %32 = sbr.rel (0) target = $region37
    $region36: #{tpu_custom_call.1} parent=1 // pred_region
      _
    $region37: #{tpu_custom_call.1} parent=1 // pred_fallthru
      _
    %p33 = scmp.eq.s32.totalorder 0, 0
    // Predicated region
    $region38: #{tpu_custom_call.1} parent=1 // pred_check
      %p34 = pneg %p33
    $region39: #{tpu_custom_call.1} parent=1 // pred_check_branch
      %36 = sbr.rel (%p34) target = $region41
    $region40: #{tpu_custom_call.1} parent=1 // pred_region
      %vm37 = vcmask 261120
      %38 = vst.msk [vmem:[#allocation2] sm:$0xff] %vm37, 0.0
      %39 = vst.msk [vmem:[#allocation3] sm:$0xff] %vm37, 0.0
    $region41: #{tpu_custom_call.1} parent=1 // pred_fallthru
      _
    %v40 = vld [vmem:[#allocation2] sm:$0xff]
    %v41 = vld [vmem:[%s0] sm:$0xf]
    %v42 = vld [vmem:[%s2] sm:$0xf]
    %v43 = vld [vmem:[%s2 + $0x4] sm:$0xf]
    %v44 = vld [vmem:[%s2 + $0x8] sm:$0xf]
    %v45 = vld [vmem:[%s2 + $0xc] sm:$0xf]
    %v46 = vld [vmem:[%s2 + $0x10] sm:$0xf]
    %v47 = vld [vmem:[%s2 + $0x14] sm:$0xf]
    %v48 = vld [vmem:[%s2 + $0x18] sm:$0xf]
    %v49 = vld [vmem:[%s2 + $0x1c] sm:$0xf]
    %v50 = vld [vmem:[%s2 + $0x20] sm:$0xf]
    %v51 = vld [vmem:[%s2 + $0x24] sm:$0xf]
    %v52 = vld [vmem:[%s2 + $0x28] sm:$0xf]
    %v53 = vld [vmem:[%s2 + $0x2c] sm:$0xf]
    %v54 = vld [vmem:[%s2 + $0x30] sm:$0xf]
    %v55 = vld [vmem:[%s2 + $0x34] sm:$0xf]
    %v56 = vld [vmem:[%s2 + $0x38] sm:$0xf]
    %v57 = vld [vmem:[%s2 + $0x3c] sm:$0xf]
    %v74 = vunpack.c.l.b16 %v42
    %v75 = vunpack.c.l.b16 %v43
    %v76 = vunpack.c.l.b16 %v44
    %v77 = vunpack.c.l.b16 %v45
    %v78 = vunpack.c.l.b16 %v46
    %v79 = vunpack.c.l.b16 %v47
    %v80 = vunpack.c.l.b16 %v48
    %v81 = vunpack.c.l.b16 %v49
    %v82 = vunpack.c.l.b16 %v50
    %v83 = vunpack.c.l.b16 %v51
    %v84 = vunpack.c.l.b16 %v52
    %v85 = vunpack.c.l.b16 %v53
    %v86 = vunpack.c.l.b16 %v54
    %v87 = vunpack.c.l.b16 %v55
    %v88 = vunpack.c.l.b16 %v56
    %v89 = vunpack.c.l.b16 %v57
    %v90 = vpack.c.b16 %v75, %v74
    %v91 = vpack.c.b16 %v77, %v76
    %v92 = vpack.c.b16 %v79, %v78
    %v93 = vpack.c.b16 %v81, %v80
    %v94 = vpack.c.b16 %v83, %v82
    %v95 = vpack.c.b16 %v85, %v84
    %v96 = vpack.c.b16 %v87, %v86
    %v97 = vpack.c.b16 %v89, %v88
    %106 = vmatpush.bf16.msra.mxu0 %v97
    %107 = vmatpush.bf16.msra.mxu0 %v96
    %108 = vmatpush.bf16.msra.mxu0 %v95
    %109 = vmatpush.bf16.msra.mxu0 %v94
    %110 = vmatpush.bf16.msra.mxu0 %v93
    %111 = vmatpush.bf16.msra.mxu0 %v92
    %112 = vmatpush.bf16.msra.mxu0 %v91
    %113 = vmatpush.bf16.msra.mxu0 %v90
    %114 = vmatmul.bf16.gmra.mxu0 %v41
    %v115 = vpop.f32.mrf.mxu0
    %v116 = vadd.f32 0.0, %v115
    %v117 = vpop.f32.mrf.mxu0
    %118 = vdwg.mxu0
    %v119 = vadd.f32 %v40, %v116
    %vm120 = vcmask 261120
    %121 = vst.msk [vmem:[#allocation2] sm:$0xff] %vm120, %v119
    %v122 = vld [vmem:[#allocation3] sm:$0xff]
    %v123 = vld [vmem:[%s1] sm:$0xf]
    %v124 = vld [vmem:[%s3] sm:$0xf]
    %v125 = vld [vmem:[%s3 + $0x4] sm:$0xf]
    %v126 = vld [vmem:[%s3 + $0x8] sm:$0xf]
    %v127 = vld [vmem:[%s3 + $0xc] sm:$0xf]
    %v128 = vld [vmem:[%s3 + $0x10] sm:$0xf]
    %v129 = vld [vmem:[%s3 + $0x14] sm:$0xf]
    %v130 = vld [vmem:[%s3 + $0x18] sm:$0xf]
    %v131 = vld [vmem:[%s3 + $0x1c] sm:$0xf]
    %v132 = vld [vmem:[%s3 + $0x20] sm:$0xf]
    %v133 = vld [vmem:[%s3 + $0x24] sm:$0xf]
    %v134 = vld [vmem:[%s3 + $0x28] sm:$0xf]
    %v135 = vld [vmem:[%s3 + $0x2c] sm:$0xf]
    %v136 = vld [vmem:[%s3 + $0x30] sm:$0xf]
    %v137 = vld [vmem:[%s3 + $0x34] sm:$0xf]
    %v138 = vld [vmem:[%s3 + $0x38] sm:$0xf]
    %v139 = vld [vmem:[%s3 + $0x3c] sm:$0xf]
    %v156 = vunpack.c.l.b16 %v124
    %v157 = vunpack.c.l.b16 %v125
    %v158 = vunpack.c.l.b16 %v126
    %v159 = vunpack.c.l.b16 %v127
    %v160 = vunpack.c.l.b16 %v128
    %v161 = vunpack.c.l.b16 %v129
    %v162 = vunpack.c.l.b16 %v130
    %v163 = vunpack.c.l.b16 %v131
    %v164 = vunpack.c.l.b16 %v132
    %v165 = vunpack.c.l.b16 %v133
    %v166 = vunpack.c.l.b16 %v134
    %v167 = vunpack.c.l.b16 %v135
    %v168 = vunpack.c.l.b16 %v136
    %v169 = vunpack.c.l.b16 %v137
    %v170 = vunpack.c.l.b16 %v138
    %v171 = vunpack.c.l.b16 %v139
    %v172 = vpack.c.b16 %v157, %v156
    %v173 = vpack.c.b16 %v159, %v158
    %v174 = vpack.c.b16 %v161, %v160
    %v175 = vpack.c.b16 %v163, %v162
    %v176 = vpack.c.b16 %v165, %v164
    %v177 = vpack.c.b16 %v167, %v166
    %v178 = vpack.c.b16 %v169, %v168
    %v179 = vpack.c.b16 %v171, %v170
    %188 = vmatpush.bf16.msra.mxu0 %v179
    %189 = vmatpush.bf16.msra.mxu0 %v178
    %190 = vmatpush.bf16.msra.mxu0 %v177
    %191 = vmatpush.bf16.msra.mxu0 %v176
    %192 = vmatpush.bf16.msra.mxu0 %v175
    %193 = vmatpush.bf16.msra.mxu0 %v174
    %194 = vmatpush.bf16.msra.mxu0 %v173
    %195 = vmatpush.bf16.msra.mxu0 %v172
    %196 = vmatmul.bf16.gmra.mxu0 %v123
    %v197 = vpop.f32.mrf.mxu0
    %v198 = vadd.f32 0.0, %v197
    %v199 = vpop.f32.mrf.mxu0
    %200 = vdwg.mxu0
    %v201 = vadd.f32 %v122, %v198
    %202 = vst.msk [vmem:[#allocation3] sm:$0xff] %vm120, %v201
    // Predicated region
    $region42: #{tpu_custom_call.1} parent=1 // pred_check
      %p203 = pneg %p33
    $region43: #{tpu_custom_call.1} parent=1 // pred_check_branch
      %205 = sbr.rel (%p203) target = $region45
    $region44: #{tpu_custom_call.1} parent=1 // pred_region
      %v206 = vld [vmem:[%s5] sm:$0xff]
      %v207 = vld [vmem:[%s5 + $0x8] sm:$0xff]
      %v208 = vld [vmem:[%s5 + $0x10] sm:$0xff]
      %v209 = vld [vmem:[%s5 + $0x18] sm:$0xff]
      %v210 = vld [vmem:[%s5 + $0x20] sm:$0xff]
      %v211 = vld [vmem:[%s5 + $0x28] sm:$0xff]
      %v212 = vld [vmem:[%s5 + $0x30] sm:$0xff]
      %v213 = vld [vmem:[%s5 + $0x38] sm:$0xff]
      %v214 = vld [vmem:[%s5 + $0x40] sm:$0xff]
      %v215 = vld [vmem:[%s5 + $0x48] sm:$0xff]
      %v216 = vld [vmem:[%s5 + $0x50] sm:$0xff]
      %v217 = vld [vmem:[%s5 + $0x58] sm:$0xff]
      %v218 = vld [vmem:[#allocation2] sm:$0xff]
      %v219 = vld [vmem:[#allocation3] sm:$0xff]
      %v221 = vsel %vm120, %v219, 0
      %223 = vmatpush.msra.mxu0 0.0
      %224 = vmatpush.msra.mxu0 0.0
      %225 = vmatpush.msra.mxu0 0.0
      %226 = vmatpush.msra.mxu0 0.0
      %227 = vmatpush.msra.mxu0 0.0
      %228 = vmatpush.msra.mxu0 0.0
      %229 = vmatpush.msra.mxu0 0.0
      %230 = vmatpush.msra.mxu0 0.0
      %231 = vmatpush.msra.mxu0 0.0
      %232 = vmatpush.msra.mxu0 0.0
      %233 = vmatpush.msra.mxu0 0.0
      %234 = vmatpush.msra.mxu0 0.0
      %235 = vmatpush.msra.mxu0 %v213
      %236 = vmatpush.msra.mxu0 %v212
      %237 = vmatpush.msra.mxu0 %v211
      %238 = vmatpush.msra.mxu0 %v210
      %239 = vmatmul.f32.gmra.mxu0 %v221
      %v240 = vpop.f32.mrf.mxu0
      %v241 = vadd.f32 0.0, %v240
      %242 = vdwg.mxu0
      %v244 = vsel %vm120, %v218, 0
      %246 = vmatpush.msra.mxu0 0.0
      %247 = vmatpush.msra.mxu0 0.0
      %248 = vmatpush.msra.mxu0 0.0
      %249 = vmatpush.msra.mxu0 0.0
      %250 = vmatpush.msra.mxu0 0.0
      %251 = vmatpush.msra.mxu0 0.0
      %252 = vmatpush.msra.mxu0 0.0
      %253 = vmatpush.msra.mxu0 0.0
      %254 = vmatpush.msra.mxu0 0.0
      %255 = vmatpush.msra.mxu0 0.0
      %256 = vmatpush.msra.mxu0 0.0
      %257 = vmatpush.msra.mxu0 0.0
      %258 = vmatpush.msra.mxu0 %v209
      %259 = vmatpush.msra.mxu0 %v208
      %260 = vmatpush.msra.mxu0 %v207
      %261 = vmatpush.msra.mxu0 %v206
      %262 = vmatmul.f32.gmra.mxu0 %v244
      %v263 = vpop.f32.mrf.mxu0
      %v264 = vadd.f32 %v241, %v263
      %265 = vdwg.mxu0
      %v266 = vld [vmem:[%s4] sm:$0xff]
      %v268 = vsel %vm120, %v266, 0
      %270 = vmatpush.msra.mxu0 0.0
      %271 = vmatpush.msra.mxu0 0.0
      %272 = vmatpush.msra.mxu0 0.0
      %273 = vmatpush.msra.mxu0 0.0
      %274 = vmatpush.msra.mxu0 0.0
      %275 = vmatpush.msra.mxu0 0.0
      %276 = vmatpush.msra.mxu0 0.0
      %277 = vmatpush.msra.mxu0 0.0
      %278 = vmatpush.msra.mxu0 0.0
      %279 = vmatpush.msra.mxu0 0.0
      %280 = vmatpush.msra.mxu0 0.0
      %281 = vmatpush.msra.mxu0 0.0
      %282 = vmatpush.msra.mxu0 %v217
      %283 = vmatpush.msra.mxu0 %v216
      %284 = vmatpush.msra.mxu0 %v215
      %285 = vmatpush.msra.mxu0 %v214
      %286 = vmatmul.f32.gmra.mxu0 %v268
      %v287 = vpop.f32.mrf.mxu0
      %v288 = vadd.f32 0.0, %v287
      %289 = vdwg.mxu0
      %v290 = vadd.f32 %v264, %v288
      %v291 = vld [vmem:[%s6] sm:$0x1]
      %v293 = vperm.slane %v291, 0
      %v295 = vadd.f32 %v290, %v293
      %vm296 = vcmp.gt.f32.partialorder %v295, 0.0
      %v297 = vmul.f32 %v295, 0.01
      %v298 = vsel %vm296, %v295, %v297
      %v299 = vld [vmem:[%s7] sm:$0xff]
      %v300 = vld [vmem:[%s7 + $0x8] sm:$0xff]
      %v301 = vld [vmem:[%s7 + $0x10] sm:$0xff]
      %v302 = vld [vmem:[%s7 + $0x18] sm:$0xff]
      %v303 = vld [vmem:[%s7 + $0x20] sm:$0xff]
      %v304 = vld [vmem:[%s7 + $0x28] sm:$0xff]
      %v305 = vld [vmem:[%s7 + $0x30] sm:$0xff]
      %v306 = vld [vmem:[%s7 + $0x38] sm:$0xff]
      %v307 = vld [vmem:[%s8] sm:$0x1]
      %v309 = vperm.slane %v307, 0
      %vm311 = vcmask 523264
      %v313 = vsel %vm311, %v298, 0
      %315 = vmatpush.msra.mxu0 0.0
      %316 = vmatpush.msra.mxu0 0.0
      %317 = vmatpush.msra.mxu0 0.0
      %318 = vmatpush.msra.mxu0 0.0
      %319 = vmatpush.msra.mxu0 0.0
      %320 = vmatpush.msra.mxu0 0.0
      %321 = vmatpush.msra.mxu0 0.0
      %322 = vmatpush.msra.mxu0 0.0
      %323 = vmatpush.msra.mxu0 %v306
      %324 = vmatpush.msra.mxu0 %v305
      %325 = vmatpush.msra.mxu0 %v304
      %326 = vmatpush.msra.mxu0 %v303
      %327 = vmatpush.msra.mxu0 %v302
      %328 = vmatpush.msra.mxu0 %v301
      %329 = vmatpush.msra.mxu0 %v300
      %330 = vmatpush.msra.mxu0 %v299
      %331 = vmatmul.f32.gmra.mxu0 %v313
      %v332 = vpop.f32.mrf.mxu0
      %v333 = vadd.f32 %v309, %v332
      %334 = vdwg.mxu0
      %335 = vst [vmem:[#allocation4] sm:$0xff] %v333
    $region45: #{tpu_custom_call.1} parent=1 // pred_fallthru
      _
    // Predicated region
    $region46: #{tpu_custom_call.1} parent=1 // pred_check
      _
    $region47: #{tpu_custom_call.1} parent=1 // pred_check_branch
      %337 = sbr.rel (0) target = $region49
    $region48: #{tpu_custom_call.1} parent=1 // pred_region
      %339 = vsyncadd [#allocation5], 0
      %s341 = sshll.u32 [#allocation4], 4
      %s342 = int_to_ptr.vmem [resolvable:$true] %s341
      %s343 = sshll.u32 %s9, 4
      %s344 = int_to_ptr.hbm [resolvable:$true] %s343
      %346 = dma.vmem_to_hbm [thread:$0]  %s342, 128, %s344, [#allocation5]
    $region49: #{tpu_custom_call.1} parent=1 // pred_fallthru
      _
    // Predicated region
    $region50: #{tpu_custom_call.1} parent=1 // pred_check
      _
    $region51: #{tpu_custom_call.1} parent=1 // pred_check_branch
      %348 = sbr.rel (0) target = $region53
    $region52: #{tpu_custom_call.1} parent=1 // pred_region
      %350 = dma.done [#allocation5], 128
    $region53: #{tpu_custom_call.1} parent=1 // pred_fallthru
      _
    %351 = vsyncpa [#allocation5], 1

</llo_original>
